<compile_context>
chip_gen: v7x
topology: tpu7x:2x2x1
jax: 0.10.0
libtpu: 0.0.40
codegen_flags: <defaults>
</compile_context>

<pallas_src>
import jax
import jax.numpy as jnp
from jax.experimental import pallas as pl
from jax.experimental.pallas import tpu as pltpu


_INV_SQRT2 = 0.7071067811865476


def _round_up(v, m):
    return ((v + m - 1) // m) * m


def _gelu_exact(x):
    # Matches torch.nn.GELU() default (erf-based).  NOTE: lax.erf lowers to a
    # VALU polynomial (not the EUP); a tanh-approx GELU would hit the EUP slot
    # but changes numerics vs. the PyTorch default, so exact erf is kept.
    return 0.5 * x * (1.0 + jax.lax.erf(x * _INV_SQRT2))


# ---------------------------------------------------------------------------
# Kernels
# ---------------------------------------------------------------------------

def _mlp_kernel_resident(x_ref, w1_ref, b1_ref, w2_ref, b2_ref, o_ref):
    """Weight-resident fast path: full fc1 -> GELU -> fc2 in one grid step."""
    h = jnp.dot(x_ref[...], w1_ref[...], preferred_element_type=jnp.float32)
    h = h + b1_ref[...].astype(jnp.float32)
    h = _gelu_exact(h)
    # TODO(synk): dropout with drop=0.0 is identity; nonzero drop would need pltpu PRNG.
    y = jnp.dot(h.astype(w2_ref.dtype), w2_ref[...],
                preferred_element_type=jnp.float32)
    o_ref[...] = (y + b2_ref[...].astype(jnp.float32)).astype(o_ref.dtype)


def _mlp_kernel_chunked(x_ref, w1_ref, b1_ref, w2_ref, b2_ref, o_ref, acc_ref):
    """Hidden-chunk streaming path: grid = (token tiles, H chunks)."""
    h_idx = pl.program_id(1)

    @pl.when(h_idx == 0)
    def _():
        acc_ref[...] = jnp.zeros_like(acc_ref)

    h = jnp.dot(x_ref[...], w1_ref[...], preferred_element_type=jnp.float32)
    h = h + b1_ref[...].astype(jnp.float32)
    h = _gelu_exact(h)
    acc_ref[...] += jnp.dot(h.astype(w2_ref.dtype), w2_ref[...],
                            preferred_element_type=jnp.float32)

    @pl.when(h_idx == pl.num_programs(1) - 1)
    def _():
        o_ref[...] = (acc_ref[...]
                      + b2_ref[...].astype(jnp.float32)).astype(o_ref.dtype)


# ---------------------------------------------------------------------------
# Wrapper
# ---------------------------------------------------------------------------

def _vmem_budget_bytes():
    """Physical VMEM minus ~16 MiB headroom for Mosaic scratch / semaphores."""
    phys = 64 << 20  # conservative fallback (v7x per-core VMEM)
    try:
        phys = int(pltpu.get_tpu_info().vmem_capacity_bytes)
    except Exception:
        pass
    # => ~48 MiB on v7x, ~112 MiB on v5e/v6e.
    return max(phys - (16 << 20), 32 << 20)


def mlp_forward(x, w1, b1, w2, b2, *, tm=512, th=1024, mxu_dtype=None,
                force_streaming=False):
    """x: (B, N, D_in); w1: (D_in, H); b1: (H,); w2: (H, D_out); b2: (D_out,).

    mxu_dtype: optional dtype (e.g. jnp.bfloat16) to cast x/w1/w2 to before
    the MXU (f32 accumulation is kept).  Default keeps the weights' dtype and
    matches x to it (no silent mixed-dtype promotion).
    """
    B, N, D_in = x.shape
    H = w1.shape[1]
    D_out = w2.shape[1]
    M = B * N

    compute_dtype = jnp.dtype(mxu_dtype) if mxu_dtype is not None else jnp.dtype(w1.dtype)
    out_dtype = x.dtype
    c_isz = compute_dtype.itemsize
    o_isz = jnp.dtype(out_dtype).itemsize

    # ---- token tiling -------------------------------------------------------
    tm_eff = min(tm, _round_up(M, 16))
    # keep >=2 token tiles so both v7x TensorCores get work on the parallel axis
    if _round_up(M, tm_eff) // tm_eff < 2 and M > 16:
        tm_eff = max(16, _round_up((M + 1) // 2, 16))

    Dip = _round_up(D_in, 128)
    Dop = _round_up(D_out, 128)           # lane-dense output stores
    Hp_min = _round_up(H, 128)

    budget = _vmem_budget_bytes()

    def resident_est(tm_, Hp_):
        return (2 * tm_ * Dip * c_isz       # x tile (double-buffered)
                + 2 * Dip * Hp_ * c_isz     # w1 (resident; pipeline keeps 2 bufs)
                + 2 * Hp_ * 4               # b1
                + 2 * Hp_ * Dop * c_isz     # w2
                + 2 * Dop * 4               # b2
                + 2 * tm_ * Dop * o_isz     # output tile
                + tm_ * Hp_ * (4 + c_isz))  # fc1 f32 activation + cast copy

    def chunked_est(tm_, th_):
        return (2 * tm_ * Dip * c_isz
                + 2 * Dip * th_ * c_isz
                + 2 * th_ * 4
                + 2 * th_ * Dop * c_isz
                + 2 * Dop * 4
                + 2 * tm_ * Dop * o_isz
                + tm_ * Dop * 4             # f32 accumulator scratch
                + tm_ * th_ * (4 + c_isz))  # fc1 chunk activation + cast copy

    # ---- path selection -----------------------------------------------------
    tm_res = tm_eff
    while resident_est(tm_res, Hp_min) > budget and tm_res > 128:
        tm_res = max(128, (tm_res // 2 // 16) * 16)
    use_resident = (not force_streaming) and resident_est(tm_res, Hp_min) <= budget

    if use_resident:
        tm_eff = tm_res
        th_eff = Hp_min
        Hp = Hp_min
    else:
        th_eff = _round_up(min(th, Hp_min), 128)
        while chunked_est(tm_eff, th_eff) > budget and th_eff > 128:
            th_eff = max(128, (th_eff // 2 // 128) * 128)
        while chunked_est(tm_eff, th_eff) > budget and tm_eff > 16:
            tm_eff = max(16, (tm_eff // 2 // 16) * 16)
        Hp = _round_up(H, th_eff)
    Mp = _round_up(M, tm_eff)

    # ---- pad + cast to TPU-friendly shapes (exact; padding sliced off) -----
    x2d = jnp.zeros((Mp, Dip), compute_dtype).at[:M, :D_in].set(
        x.reshape(M, D_in).astype(compute_dtype))
    w1p = jnp.zeros((Dip, Hp), compute_dtype).at[:D_in, :H].set(
        w1.astype(compute_dtype))
    b1p = jnp.zeros((1, Hp), jnp.float32).at[0, :H].set(b1.astype(jnp.float32))
    w2p = jnp.zeros((Hp, Dop), compute_dtype).at[:H, :D_out].set(
        w2.astype(compute_dtype))
    b2p = jnp.zeros((1, Dop), jnp.float32).at[0, :D_out].set(b2.astype(jnp.float32))

    est = resident_est(tm_eff, Hp) if use_resident else chunked_est(tm_eff, th_eff)
    vmem_limit = int(min(budget, max(_round_up(est * 5 // 4, 1 << 20), 32 << 20)))

    n_token_tiles = Mp // tm_eff
    weight_bytes = (w1p.size + w2p.size) * c_isz
    if use_resident:
        bytes_accessed = (x2d.size * c_isz + weight_bytes
                          + (b1p.size + b2p.size) * 4 + Mp * Dop * o_isz)
    else:
        # honest HBM picture: weights are re-streamed once per token tile
        bytes_accessed = (x2d.size * c_isz + n_token_tiles * weight_bytes
                          + n_token_tiles * (b1p.size + b2p.size) * 4
                          + Mp * Dop * o_isz)
    cost = pl.CostEstimate(flops=2 * Mp * Hp * (Dip + Dop),
                           transcendentals=Mp * Hp,
                           bytes_accessed=int(bytes_accessed))

    if use_resident:
        out2d = pl.pallas_call(
            _mlp_kernel_resident,
            out_shape=jax.ShapeDtypeStruct((Mp, Dop), out_dtype),
            grid_spec=pltpu.PrefetchScalarGridSpec(
                num_scalar_prefetch=0,
                grid=(n_token_tiles,),
                in_specs=[
                    pl.BlockSpec((tm_eff, Dip), lambda i: (i, 0)),  # x token tile
                    pl.BlockSpec((Dip, Hp), lambda i: (0, 0)),      # w1 (resident)
                    pl.BlockSpec((1, Hp), lambda i: (0, 0)),        # b1
                    pl.BlockSpec((Hp, Dop), lambda i: (0, 0)),      # w2 (resident)
                    pl.BlockSpec((1, Dop), lambda i: (0, 0)),       # b2
                ],
                out_specs=pl.BlockSpec((tm_eff, Dop), lambda i: (i, 0)),
            ),
            compiler_params=pltpu.CompilerParams(
                dimension_semantics=("parallel",),
                vmem_limit_bytes=vmem_limit),
            cost_estimate=cost,
        )(x2d, w1p, b1p, w2p, b2p)
    else:
        out2d = pl.pallas_call(
            _mlp_kernel_chunked,
            out_shape=jax.ShapeDtypeStruct((Mp, Dop), out_dtype),
            grid_spec=pltpu.PrefetchScalarGridSpec(
                num_scalar_prefetch=0,
                grid=(n_token_tiles, Hp // th_eff),
                in_specs=[
                    pl.BlockSpec((tm_eff, Dip), lambda i, h: (i, 0)),  # x tile
                    pl.BlockSpec((Dip, th_eff), lambda i, h: (0, h)),  # w1 chunk
                    pl.BlockSpec((1, th_eff), lambda i, h: (0, h)),    # b1 chunk
                    pl.BlockSpec((th_eff, Dop), lambda i, h: (h, 0)),  # w2 chunk
                    pl.BlockSpec((1, Dop), lambda i, h: (0, 0)),       # b2
                ],
                out_specs=pl.BlockSpec((tm_eff, Dop), lambda i, h: (i, 0)),
                scratch_shapes=[pltpu.VMEM((tm_eff, Dop), jnp.float32)],
            ),
            compiler_params=pltpu.CompilerParams(
                dimension_semantics=("parallel", "arbitrary"),
                vmem_limit_bytes=vmem_limit),
            cost_estimate=cost,
        )(x2d, w1p, b1p, w2p, b2p)

    return out2d[:M, :D_out].reshape(B, N, D_out)


def init_mlp_params(key, in_features, hidden_features, out_features,
                    dtype=jnp.float32):
    # Deterministic synthetic init mimicking nn.Linear's U(-1/sqrt(fan_in), +)
    k1, k2, k3, k4 = jax.random.split(key, 4)
    lim1 = 1.0 / float(jnp.sqrt(in_features))
    lim2 = 1.0 / float(jnp.sqrt(hidden_features))
    # stored as (in, out) so kernel does x @ W (equivalent to torch's x @ W.T)
    w1 = jax.random.uniform(k1, (in_features, hidden_features), dtype, -lim1, lim1)
    b1 = jax.random.uniform(k2, (hidden_features,), dtype, -lim1, lim1)
    w2 = jax.random.uniform(k3, (hidden_features, out_features), dtype, -lim2, lim2)
    b2 = jax.random.uniform(k4, (out_features,), dtype, -lim2, lim2)
    return w1, b1, w2, b2


if __name__ == "__main__":
    # Small shapes chosen so the kernel exercises token padding (M=24 -> 32,
    # split into 2 token tiles) and, in the forced-streaming run, multiple
    # hidden-chunk accumulation steps (H=300 -> 3 chunks of 128).
    B, N, D_in = 2, 12, 32
    H = 300          # hidden_features
    D_out = D_in     # out_features defaults to in_features

    key = jax.random.PRNGKey(0)
    kx, kp = jax.random.split(key)
    x = jax.random.normal(kx, (B, N, D_in), dtype=jnp.float32)
    w1, b1, w2, b2 = init_mlp_params(kp, D_in, H, D_out)

    # reference in plain JAX (exact GELU, high-precision matmuls)
    hp = jax.lax.Precision.HIGHEST
    ref = jnp.dot(x, w1, precision=hp) + b1
    ref = jax.nn.gelu(ref, approximate=False)
    ref = jnp.dot(ref, w2, precision=hp) + b2

    # 1) weight-resident fast path, native f32
    out_res = mlp_forward(x, w1, b1, w2, b2)
    jax.block_until_ready(out_res)
    assert out_res.shape == (B, N, D_out)
    assert jnp.allclose(out_res, ref, atol=1e-4, rtol=1e-4)

    # 2) hidden-chunk streaming fallback (forced), native f32
    out_chunk = mlp_forward(x, w1, b1, w2, b2, th=128, force_streaming=True)
    jax.block_until_ready(out_chunk)
    assert jnp.allclose(out_chunk, ref, atol=1e-4, rtol=1e-4)

    # 3) bf16-MXU recipe for v6e/v7x: bf16 operands, f32 accumulation
    out_bf16 = mlp_forward(x, w1, b1, w2, b2, mxu_dtype=jnp.bfloat16)
    jax.block_until_ready(out_bf16)
    assert jnp.allclose(out_bf16, ref, atol=5e-2, rtol=5e-2)

    print("KERNEL_OK")
</pallas_src>

<mosaic_0001>
module attributes {stable_mosaic.version = 11 : i64} {
  func.func @_mlp_kernel_resident(%arg0: i32, %arg1: memref<16x128xf32, #tpu.memory_space<vmem>>, %arg2: memref<128x384xf32, #tpu.memory_space<vmem>>, %arg3: memref<1x384xf32, #tpu.memory_space<vmem>>, %arg4: memref<384x128xf32, #tpu.memory_space<vmem>>, %arg5: memref<1x128xf32, #tpu.memory_space<vmem>>, %arg6: memref<16x128xf32, #tpu.memory_space<vmem>>) attributes {dimension_semantics = [#tpu.dimension_semantics<parallel>], iteration_bounds = array<i64: 2>, scalar_prefetch = 0 : i64, scratch_operands = 0 : i64, tpu.core_type = #tpu.core_type<tc>, window_params = [{transform_indices = @transform_0, window_bounds = array<i64: 16, 128>}, {pipeline_mode = #tpu.pipeline_mode<synchronous>, transform_indices = @transform_1, window_bounds = array<i64: 128, 384>}, {pipeline_mode = #tpu.pipeline_mode<synchronous>, transform_indices = @transform_2, window_bounds = array<i64: 1, 384>}, {pipeline_mode = #tpu.pipeline_mode<synchronous>, transform_indices = @transform_3, window_bounds = array<i64: 384, 128>}, {pipeline_mode = #tpu.pipeline_mode<synchronous>, transform_indices = @transform_4, window_bounds = array<i64: 1, 128>}, {transform_indices = @transform_5, window_bounds = array<i64: 16, 128>}]} {
    %c0 = arith.constant 0 : index
    %c0_0 = arith.constant 0 : index
    %0 = vector.load %arg1[%c0, %c0_0] : memref<16x128xf32, #tpu.memory_space<vmem>>, vector<16x128xf32>
    %c0_1 = arith.constant 0 : index
    %c0_2 = arith.constant 0 : index
    %1 = vector.load %arg2[%c0_1, %c0_2] : memref<128x384xf32, #tpu.memory_space<vmem>>, vector<128x384xf32>
    %cst = arith.constant dense<0.000000e+00> : vector<16x384xf32>
    %2 = tpu.matmul %0, %1, %cst {dimension_numbers = #tpu.dot_dimension_numbers<[1], [0], [0], [1], [0, 0, 1, 1], [], []>} : vector<16x128xf32>, vector<128x384xf32>, vector<16x384xf32> -> vector<16x384xf32>
    %c0_3 = arith.constant 0 : index
    %c0_4 = arith.constant 0 : index
    %3 = vector.load %arg3[%c0_3, %c0_4] : memref<1x384xf32, #tpu.memory_space<vmem>>, vector<1x384xf32>
    %4 = vector.broadcast %3 : vector<1x384xf32> to vector<16x384xf32>
    %5 = arith.addf %2, %4 : vector<16x384xf32>
    %cst_5 = arith.constant 5.000000e-01 : f32
    %6 = vector.broadcast %cst_5 : f32 to vector<16x384xf32>
    %7 = arith.mulf %6, %5 : vector<16x384xf32>
    %cst_6 = arith.constant 0.707106769 : f32
    %8 = vector.broadcast %cst_6 : f32 to vector<16x384xf32>
    %9 = arith.mulf %5, %8 : vector<16x384xf32>
    %10 = math.erf %9 : vector<16x384xf32>
    %cst_7 = arith.constant 1.000000e+00 : f32
    %11 = vector.broadcast %cst_7 : f32 to vector<16x384xf32>
    %12 = arith.addf %11, %10 : vector<16x384xf32>
    %13 = arith.mulf %7, %12 : vector<16x384xf32>
    %c0_8 = arith.constant 0 : index
    %c0_9 = arith.constant 0 : index
    %14 = vector.load %arg4[%c0_8, %c0_9] : memref<384x128xf32, #tpu.memory_space<vmem>>, vector<384x128xf32>
    %cst_10 = arith.constant dense<0.000000e+00> : vector<16x128xf32>
    %15 = tpu.matmul %13, %14, %cst_10 {dimension_numbers = #tpu.dot_dimension_numbers<[1], [0], [0], [1], [0, 0, 1, 1], [], []>} : vector<16x384xf32>, vector<384x128xf32>, vector<16x128xf32> -> vector<16x128xf32>
    %c0_11 = arith.constant 0 : index
    %c0_12 = arith.constant 0 : index
    %16 = vector.load %arg5[%c0_11, %c0_12] : memref<1x128xf32, #tpu.memory_space<vmem>>, vector<1x128xf32>
    %17 = vector.broadcast %16 : vector<1x128xf32> to vector<16x128xf32>
    %18 = arith.addf %15, %17 : vector<16x128xf32>
    %c0_13 = arith.constant 0 : index
    %c0_14 = arith.constant 0 : index
    %19 = vector.load %arg6[%c0_13, %c0_14] : memref<16x128xf32, #tpu.memory_space<vmem>>, vector<16x128xf32>
    tpu.vector_store %arg6[%c0_13, %c0_14], %18 {strides = array<i32>} : memref<16x128xf32, #tpu.memory_space<vmem>>, vector<16x128xf32>,
    return
  }
  func.func @transform_0(%arg0: i32) -> (i32, i32) {
    %c0_i32 = arith.constant 0 : i32
    %c0_i32_0 = arith.constant 0 : i32
    return %arg0, %c0_i32 : i32, i32
  }
  func.func @transform_1(%arg0: i32) -> (i32, i32) {
    %c0_i32 = arith.constant 0 : i32
    %c0_i32_0 = arith.constant 0 : i32
    %c0_i32_1 = arith.constant 0 : i32
    return %c0_i32, %c0_i32_0 : i32, i32
  }
  func.func @transform_2(%arg0: i32) -> (i32, i32) {
    %c0_i32 = arith.constant 0 : i32
    %c0_i32_0 = arith.constant 0 : i32
    %c0_i32_1 = arith.constant 0 : i32
    return %c0_i32, %c0_i32_0 : i32, i32
  }
  func.func @transform_3(%arg0: i32) -> (i32, i32) {
    %c0_i32 = arith.constant 0 : i32
    %c0_i32_0 = arith.constant 0 : i32
    %c0_i32_1 = arith.constant 0 : i32
    return %c0_i32, %c0_i32_0 : i32, i32
  }
  func.func @transform_4(%arg0: i32) -> (i32, i32) {
    %c0_i32 = arith.constant 0 : i32
    %c0_i32_0 = arith.constant 0 : i32
    %c0_i32_1 = arith.constant 0 : i32
    return %c0_i32, %c0_i32_0 : i32, i32
  }
  func.func @transform_5(%arg0: i32) -> (i32, i32) {
    %c0_i32 = arith.constant 0 : i32
    %c0_i32_0 = arith.constant 0 : i32
    return %arg0, %c0_i32 : i32, i32
  }
}

</mosaic_0001>

<llo_original>
// kernel: tpu_custom_call.1
$region0: #{tpu_custom_call.1}
  #allocation0 [shape = 'u32[]', space=smem, size = 0x4, offset = 0x4, fixed_abs, tag = 'smem constant byte address 0x4 - core index']
  #allocation1 [shape = 'u32[144,128]{1,0:T(1,128)}', space=vmem, size = 0x12000, scoped, tag = 'internal scratch']
  %s0 = inlined_call_operand.hbm [shape: f32[32,128], index: 0, kind: input, shape index: {}]
  %s1 = inlined_call_operand.hbm [shape: f32[128,384], index: 1, kind: input, shape index: {}]
  %s2 = inlined_call_operand.vmem [shape: f32[1,384], index: 2, kind: input, shape index: {}]
  %s3 = inlined_call_operand.hbm [shape: f32[384,128], index: 3, kind: input, shape index: {}]
  %s4 = inlined_call_operand.vmem [shape: f32[1,128], index: 4, kind: input, shape index: {}]
  %s5 = inlined_call_operand.hbm [shape: f32[32,128], index: 5, kind: output, shape index: {}]
  %s6 = sld [smem:[#allocation0]]
  $region65: #{tpu_custom_call.1} parent=0
    _
  %s8 = ssub.s32 1, %s6
  %s9 = scalar_select 0, %s8, %s6
  $region1: #{tpu_custom_call.1} parent=0
    #allocation2 [shape = 'u8[16384]{0}', space=vmem, size = 0x4000, scoped, tag = 'input window, operand 0']
    #allocation3 [shape = 's32[2]{0}', space=sflag, size = 0x8, scoped, tag = 'scoped memory for tpu_custom_call.1']
    #allocation4 [shape = 's32[2]{0}', space=sflag, size = 0x8, scoped, tag = 'scoped memory for tpu_custom_call.1']
    #allocation5 [shape = 'u8[196608]{0}', space=vmem, size = 0x30000, scoped, tag = 'input window, operand 1, single buffered']
    #allocation6 [shape = 's32[1]{0}', space=sflag, size = 0x4, scoped, tag = 'scoped memory for tpu_custom_call.1']
    #allocation7 [shape = 'u8[196608]{0}', space=vmem, size = 0x30000, scoped, tag = 'input window, operand 3, single buffered']
    #allocation8 [shape = 'u8[16384]{0}', space=vmem, size = 0x4000, scoped, tag = 'output window, operand 0']
    %10 = vsyncpa [#allocation3], 0
    %s11 = scalar_lea.sflag [#allocation3], 1
    %12 = vsyncpa %s11, 0
    %13 = vsyncpa [#allocation6], 0
    %14 = vsyncpa [#allocation4], 0
    %s15 = scalar_lea.sflag [#allocation4], 1
    %16 = vsyncpa %s15, 0
    loop: start=0, step=1, limit=4
    $region2: #{tpu_custom_call.1} parent=1 // loop_pre_header
      _
    $region3: #{tpu_custom_call.1} parent=1 // loop_header
      %s18 = sphi 0, %s22
      %p19 = scmp.ge.s32.totalorder %s18, 4
      %s28 = sphi 0, %s30
      %s31 = sphi 0, %s28
      %s32 = sphi 0, %s31
      %s48 = sphi 0, %s32
      %s52 = sphi 0, %s52
      %s54 = sphi 0, %s52
      %s55 = sphi 0, %s54
      %s69 = sphi 0, %s55
      %s73 = sphi 0, %s73
      %s75 = sphi 0, %s73
      %s76 = sphi 0, %s75
      %s90 = sphi 0, %s76
      %s94 = sphi 0, %s94
      %s96 = sphi 0, %s94
      %s97 = sphi 0, %s96
      %s111 = sphi 0, %s97
      %s115 = sphi 0, %s115
      %s117 = sphi 0, %s115
      %s118 = sphi 0, %s117
      %s132 = sphi 0, %s118
      %s138 = sphi 0, %s140
      %s141 = sphi 0, %s138
      %s142 = sphi 0, %s141
      %s158 = sphi 0, %s142
    $region4: #{tpu_custom_call.1} parent=1 // loop_header_branch
      %21 = sbr.rel (%p19) target = $region8
    $region5: #{tpu_custom_call.1} parent=1 // loop_body
      %s23 = ssub.s32 %s18, 1
      %s24 = ssub.s32 %s18, 2
      %s25 = sadd.s32 %s18, 1
      %s26 = ssub.s32 %s18, %s25
      %p27 = scmp.eq.s32.totalorder %s26, 0
      %s29 = sadd.s32 %s28, 1
      %s30 = scalar_select %p27, %s28, %s29
      %p33 = pneg %p27
      %p34 = scmp.eq.s32.totalorder %s18, 1
      %p35 = por %p33, %p34
      %p36 = scmp.ne.s32.totalorder %s28, %s31
      %p37 = scmp.eq.s32.totalorder %s18, 0
      %p38 = por %p36, %p37
      %p39 = scmp.ne.s32.totalorder %s28, %s31
      %p40 = scmp.eq.s32.totalorder %s23, 1
      %p41 = por %p39, %p40
      %p42 = scmp.ne.s32.totalorder %s31, %s32
      %p43 = scmp.eq.s32.totalorder %s23, 0
      %p44 = por %p42, %p43
      %p45 = scmp.ne.s32.totalorder %s31, %s32
      %p46 = scmp.eq.s32.totalorder %s24, 1
      %p47 = por %p45, %p46
      %p49 = scmp.ne.s32.totalorder %s32, %s48
      %p50 = scmp.eq.s32.totalorder %s24, 0
      %p51 = por %p49, %p50
      %s53 = sadd.s32 %s52, 1
      %p56 = scmp.eq.s32.totalorder %s18, 1
      %p57 = scmp.ne.s32.totalorder %s52, %s54
      %p58 = scmp.eq.s32.totalorder %s18, 0
      %p59 = por %p57, %p58
      %p60 = scmp.ne.s32.totalorder %s52, %s54
      %p61 = scmp.eq.s32.totalorder %s23, 1
      %p62 = por %p60, %p61
      %p63 = scmp.ne.s32.totalorder %s54, %s55
      %p64 = scmp.eq.s32.totalorder %s23, 0
      %p65 = por %p63, %p64
      %p66 = scmp.ne.s32.totalorder %s54, %s55
      %p67 = scmp.eq.s32.totalorder %s24, 1
      %p68 = por %p66, %p67
      %p70 = scmp.ne.s32.totalorder %s55, %s69
      %p71 = scmp.eq.s32.totalorder %s24, 0
      %p72 = por %p70, %p71
      %s74 = sadd.s32 %s73, 1
      %p77 = scmp.eq.s32.totalorder %s18, 1
      %p78 = scmp.ne.s32.totalorder %s73, %s75
      %p79 = scmp.eq.s32.totalorder %s18, 0
      %p80 = por %p78, %p79
      %p81 = scmp.ne.s32.totalorder %s73, %s75
      %p82 = scmp.eq.s32.totalorder %s23, 1
      %p83 = por %p81, %p82
      %p84 = scmp.ne.s32.totalorder %s75, %s76
      %p85 = scmp.eq.s32.totalorder %s23, 0
      %p86 = por %p84, %p85
      %p87 = scmp.ne.s32.totalorder %s75, %s76
      %p88 = scmp.eq.s32.totalorder %s24, 1
      %p89 = por %p87, %p88
      %p91 = scmp.ne.s32.totalorder %s76, %s90
      %p92 = scmp.eq.s32.totalorder %s24, 0
      %p93 = por %p91, %p92
      %s95 = sadd.s32 %s94, 1
      %p98 = scmp.eq.s32.totalorder %s18, 1
      %p99 = scmp.ne.s32.totalorder %s94, %s96
      %p100 = scmp.eq.s32.totalorder %s18, 0
      %p101 = por %p99, %p100
      %p102 = scmp.ne.s32.totalorder %s94, %s96
      %p103 = scmp.eq.s32.totalorder %s23, 1
      %p104 = por %p102, %p103
      %p105 = scmp.ne.s32.totalorder %s96, %s97
      %p106 = scmp.eq.s32.totalorder %s23, 0
      %p107 = por %p105, %p106
      %p108 = scmp.ne.s32.totalorder %s96, %s97
      %p109 = scmp.eq.s32.totalorder %s24, 1
      %p110 = por %p108, %p109
      %p112 = scmp.ne.s32.totalorder %s97, %s111
      %p113 = scmp.eq.s32.totalorder %s24, 0
      %p114 = por %p112, %p113
      %s116 = sadd.s32 %s115, 1
      %p119 = scmp.eq.s32.totalorder %s18, 1
      %p120 = scmp.ne.s32.totalorder %s115, %s117
      %p121 = scmp.eq.s32.totalorder %s18, 0
      %p122 = por %p120, %p121
      %p123 = scmp.ne.s32.totalorder %s115, %s117
      %p124 = scmp.eq.s32.totalorder %s23, 1
      %p125 = por %p123, %p124
      %p126 = scmp.ne.s32.totalorder %s117, %s118
      %p127 = scmp.eq.s32.totalorder %s23, 0
      %p128 = por %p126, %p127
      %p129 = scmp.ne.s32.totalorder %s117, %s118
      %p130 = scmp.eq.s32.totalorder %s24, 1
      %p131 = por %p129, %p130
      %p133 = scmp.ne.s32.totalorder %s118, %s132
      %p134 = scmp.eq.s32.totalorder %s24, 0
      %p135 = por %p133, %p134
      %s136 = ssub.s32 %s18, %s25
      %p137 = scmp.eq.s32.totalorder %s136, 0
      %s139 = sadd.s32 %s138, 1
      %s140 = scalar_select %p137, %s138, %s139
      %p143 = pneg %p137
      %p144 = scmp.eq.s32.totalorder %s18, 1
      %p145 = por %p143, %p144
      %p146 = scmp.ne.s32.totalorder %s138, %s141
      %p147 = scmp.eq.s32.totalorder %s18, 0
      %p148 = por %p146, %p147
      %p149 = scmp.ne.s32.totalorder %s138, %s141
      %p150 = scmp.eq.s32.totalorder %s23, 1
      %p151 = por %p149, %p150
      %p152 = scmp.ne.s32.totalorder %s141, %s142
      %p153 = scmp.eq.s32.totalorder %s23, 0
      %p154 = por %p152, %p153
      %p155 = scmp.ne.s32.totalorder %s141, %s142
      %p156 = scmp.eq.s32.totalorder %s24, 1
      %p157 = por %p155, %p156
      %p159 = scmp.ne.s32.totalorder %s142, %s158
      %p160 = scmp.eq.s32.totalorder %s24, 0
      %p161 = por %p159, %p160
      %p162 = scmp.le.s32.totalorder 1, %s18
      %p163 = scmp.lt.s32.totalorder %s18, 3
      %p164 = pnand %p162, %p163
      %p165 = pneg %p164
      // Predicated region
      $region9: #{tpu_custom_call.1} parent=5 // pred_check
        _
      $region10: #{tpu_custom_call.1} parent=5 // pred_check_branch
        %167 = sbr.rel (%p164) target = $region12
      $region11: #{tpu_custom_call.1} parent=5 // pred_region
        %s168 = ssub.s32 %s18, 1
        // Predicated region
        $region13: #{tpu_custom_call.1} parent=11 // pred_check
          %p169 = pneg %p65
        $region14: #{tpu_custom_call.1} parent=11 // pred_check_branch
          %171 = sbr.rel (%p169) target = $region16
        $region15: #{tpu_custom_call.1} parent=11 // pred_region
          %s173 = ssub.s32 6144, 6144
          %174 = vsyncadd [#allocation6], %s173
          %s175 = sshll.u32 [#allocation5], 4
          %s176 = int_to_ptr.vmem [resolvable:$true] %s175
          %181 = dma.hbm_to_vmem [thread:$0]  %s1, 6144, %s176, [#allocation6], 384, 384, 24
        $region16: #{tpu_custom_call.1} parent=11 // pred_fallthru
          _
        // Predicated region
        $region17: #{tpu_custom_call.1} parent=11 // pred_check
          %p182 = pneg %p86
        $region18: #{tpu_custom_call.1} parent=11 // pred_check_branch
          %184 = sbr.rel (%p182) target = $region20
        $region19: #{tpu_custom_call.1} parent=11 // pred_region
          _
        $region20: #{tpu_custom_call.1} parent=11 // pred_fallthru
          _
        // Predicated region
        $region21: #{tpu_custom_call.1} parent=11 // pred_check
          %p185 = pneg %p107
        $region22: #{tpu_custom_call.1} parent=11 // pred_check_branch
          %187 = sbr.rel (%p185) target = $region24
        $region23: #{tpu_custom_call.1} parent=11 // pred_region
          %s189 = ssub.s32 6144, 6144
          %190 = vsyncadd [#allocation6], %s189
          %s191 = sshll.u32 [#allocation7], 4
          %s192 = int_to_ptr.vmem [resolvable:$true] %s191
          %197 = dma.hbm_to_vmem [thread:$0]  %s3, 6144, %s192, [#allocation6], 128, 128, 8
        $region24: #{tpu_custom_call.1} parent=11 // pred_fallthru
          _
        // Predicated region
        $region25: #{tpu_custom_call.1} parent=11 // pred_check
          %p198 = pneg %p128
        $region26: #{tpu_custom_call.1} parent=11 // pred_check_branch
          %200 = sbr.rel (%p198) target = $region28
        $region27: #{tpu_custom_call.1} parent=11 // pred_region
          _
        $region28: #{tpu_custom_call.1} parent=11 // pred_fallthru
          _
      $region12: #{tpu_custom_call.1} parent=5 // pred_fallthru
        _
      %p201 = scmp.lt.s32.totalorder %s18, 2
      // Predicated region
      $region29: #{tpu_custom_call.1} parent=5 // pred_check
        %p202 = pneg %p201
      $region30: #{tpu_custom_call.1} parent=5 // pred_check_branch
        %204 = sbr.rel (%p202) target = $region32
      $region31: #{tpu_custom_call.1} parent=5 // pred_region
        // Predicated region
        $region33: #{tpu_custom_call.1} parent=31 // pred_check
          %p205 = pneg %p38
        $region34: #{tpu_custom_call.1} parent=31 // pred_check_branch
          %207 = sbr.rel (%p205) target = $region36
        $region35: #{tpu_custom_call.1} parent=31 // pred_region
          %s208 = sand.u32 %s28, 1
          %s209 = scalar_lea.sflag [#allocation3], %s208
          %s210 = sand.u32 %s28, 1
          %s211 = smul.addr %s210, 16
          %s212 = scalar_lea.vmem [#allocation2], %s211
          %s213 = smul.u32 2, %s18
          %s215 = ssub.s32 256, 256
          %216 = vsyncadd %s209, %s215
          %s217 = smul.addr %s213, 128
          %s218 = scalar_lea.hbm %s0, %s217
          %s219 = sshll.u32 %s212, 4
          %s220 = int_to_ptr.vmem [resolvable:$true] %s219
          %225 = dma.hbm_to_vmem [thread:$0]  %s218, 256, %s220, %s209, 128, 128, 8
        $region36: #{tpu_custom_call.1} parent=31 // pred_fallthru
          _
      $region32: #{tpu_custom_call.1} parent=5 // pred_fallthru
        _
      %p226 = scmp.le.s32.totalorder 1, %s18
      %p227 = scmp.lt.s32.totalorder %s18, 3
      %p228 = pnand %p226, %p227
      %p229 = pneg %p228
      // Predicated region
      $region37: #{tpu_custom_call.1} parent=5 // pred_check
        _
      $region38: #{tpu_custom_call.1} parent=5 // pred_check_branch
        %231 = sbr.rel (%p228) target = $region40
      $region39: #{tpu_custom_call.1} parent=5 // pred_region
        %s232 = ssub.s32 %s18, 1
        %s233 = sand.u32 %s31, 1
        %s234 = scalar_lea.sflag [#allocation3], %s233
        %s235 = sand.u32 %s31, 1
        %s236 = smul.addr %s235, 16
        %s237 = scalar_lea.vmem [#allocation2], %s236
        // Predicated region
        $region41: #{tpu_custom_call.1} parent=39 // pred_check
          %p238 = pneg %p44
        $region42: #{tpu_custom_call.1} parent=39 // pred_check_branch
          %240 = sbr.rel (%p238) target = $region44
        $region43: #{tpu_custom_call.1} parent=39 // pred_region
          %241 = dma.done %s234, 256
        $region44: #{tpu_custom_call.1} parent=39 // pred_fallthru
          _
        // Predicated region
        $region45: #{tpu_custom_call.1} parent=39 // pred_check
          %p242 = pneg %p65
        $region46: #{tpu_custom_call.1} parent=39 // pred_check_branch
          %244 = sbr.rel (%p242) target = $region48
        $region47: #{tpu_custom_call.1} parent=39 // pred_region
          %245 = dma.done [#allocation6], 6144
        $region48: #{tpu_custom_call.1} parent=39 // pred_fallthru
          _
        // Predicated region
        $region49: #{tpu_custom_call.1} parent=39 // pred_check
          %p246 = pneg %p107
        $region50: #{tpu_custom_call.1} parent=39 // pred_check_branch
          %248 = sbr.rel (%p246) target = $region52
        $region51: #{tpu_custom_call.1} parent=39 // pred_region
          %249 = dma.done [#allocation6], 6144
        $region52: #{tpu_custom_call.1} parent=39 // pred_fallthru
          _
        %s250 = sand.u32 %s31, 1
        %s251 = scalar_lea.sflag [#allocation3], %s250
        %s252 = sand.u32 %s31, 1
        %s253 = smul.addr %s252, 16
        %s254 = scalar_lea.vmem [#allocation2], %s253
        %p255 = pneg %p44
        %p256 = pneg %p41
        %p257 = pneg %p65
        %p258 = pneg %p62
        %p259 = pneg %p86
        %p260 = pneg %p83
        %p261 = pneg %p107
        %p262 = pneg %p104
        %p263 = pneg %p128
        %p264 = pneg %p125
        %p265 = pneg %p154
        %p266 = pneg %p151
        %s267 = sand.u32 %s141, 1
        %s268 = scalar_lea.sflag [#allocation4], %s267
        %s269 = sand.u32 %s141, 1
        %s270 = smul.addr %s269, 16
        %s271 = scalar_lea.vmem [#allocation8], %s270
        %s272 = smul.u32 2, %s23
        %s273 = smul.u32 2, %s23
        %v274 = vld [vmem:[%s237] sm:$0xff]
        %v275 = vld [vmem:[%s237 + $0x8] sm:$0xff]
        %v276 = vld [vmem:[#allocation5] sm:$0xff]
        %v277 = vld [vmem:[#allocation5 + $0x8] sm:$0xff]
        %v278 = vld [vmem:[#allocation5 + $0x10] sm:$0xff]
        %v279 = vld [vmem:[#allocation5 + $0x18] sm:$0xff]
        %v280 = vld [vmem:[#allocation5 + $0x20] sm:$0xff]
        %v281 = vld [vmem:[#allocation5 + $0x28] sm:$0xff]
        %v282 = vld [vmem:[#allocation5 + $0x30] sm:$0xff]
        %v283 = vld [vmem:[#allocation5 + $0x38] sm:$0xff]
        %v284 = vld [vmem:[#allocation5 + $0x40] sm:$0xff]
        %v285 = vld [vmem:[#allocation5 + $0x48] sm:$0xff]
        %v286 = vld [vmem:[#allocation5 + $0x50] sm:$0xff]
        %v287 = vld [vmem:[#allocation5 + $0x58] sm:$0xff]
        %v288 = vld [vmem:[#allocation5 + $0x60] sm:$0xff]
        %v289 = vld [vmem:[#allocation5 + $0x68] sm:$0xff]
        %v290 = vld [vmem:[#allocation5 + $0x70] sm:$0xff]
        %v291 = vld [vmem:[#allocation5 + $0x78] sm:$0xff]
        %v292 = vld [vmem:[#allocation5 + $0x80] sm:$0xff]
        %v293 = vld [vmem:[#allocation5 + $0x88] sm:$0xff]
        %v294 = vld [vmem:[#allocation5 + $0x90] sm:$0xff]
        %v295 = vld [vmem:[#allocation5 + $0x98] sm:$0xff]
        %v296 = vld [vmem:[#allocation5 + $0xa0] sm:$0xff]
        %v297 = vld [vmem:[#allocation5 + $0xa8] sm:$0xff]
        %v298 = vld [vmem:[#allocation5 + $0xb0] sm:$0xff]
        %v299 = vld [vmem:[#allocation5 + $0xb8] sm:$0xff]
        %v300 = vld [vmem:[#allocation5 + $0xc0] sm:$0xff]
        %v301 = vld [vmem:[#allocation5 + $0xc8] sm:$0xff]
        %v302 = vld [vmem:[#allocation5 + $0xd0] sm:$0xff]
        %v303 = vld [vmem:[#allocation5 + $0xd8] sm:$0xff]
        %v304 = vld [vmem:[#allocation5 + $0xe0] sm:$0xff]
        %v305 = vld [vmem:[#allocation5 + $0xe8] sm:$0xff]
        %v306 = vld [vmem:[#allocation5 + $0xf0] sm:$0xff]
        %v307 = vld [vmem:[#allocation5 + $0xf8] sm:$0xff]
        %v308 = vld [vmem:[#allocation5 + $0x100] sm:$0xff]
        %v309 = vld [vmem:[#allocation5 + $0x108] sm:$0xff]
        %v310 = vld [vmem:[#allocation5 + $0x110] sm:$0xff]
        %v311 = vld [vmem:[#allocation5 + $0x118] sm:$0xff]
        %v312 = vld [vmem:[#allocation5 + $0x120] sm:$0xff]
        %v313 = vld [vmem:[#allocation5 + $0x128] sm:$0xff]
        %v314 = vld [vmem:[#allocation5 + $0x130] sm:$0xff]
        %v315 = vld [vmem:[#allocation5 + $0x138] sm:$0xff]
        %v316 = vld [vmem:[#allocation5 + $0x140] sm:$0xff]
        %v317 = vld [vmem:[#allocation5 + $0x148] sm:$0xff]
        %v318 = vld [vmem:[#allocation5 + $0x150] sm:$0xff]
        %v319 = vld [vmem:[#allocation5 + $0x158] sm:$0xff]
        %v320 = vld [vmem:[#allocation5 + $0x160] sm:$0xff]
        %v321 = vld [vmem:[#allocation5 + $0x168] sm:$0xff]
        %v322 = vld [vmem:[#allocation5 + $0x170] sm:$0xff]
        %v323 = vld [vmem:[#allocation5 + $0x178] sm:$0xff]
        %v324 = vld [vmem:[%s2] sm:$0x7]
        %v326 = vlaneseq
        %v327 = vshrl.u32 %v326, 7
        %v328 = vsub.s32 0, %v327
        %v329 = vrot.slane %v324, %v328
        %v330 = vlaneseq
        %v331 = vshrl.u32 %v330, 7
        %v332 = vsub.s32 1, %v331
        %v333 = vrot.slane %v324, %v332
        %v334 = vlaneseq
        %v335 = vshrl.u32 %v334, 7
        %v336 = vsub.s32 2, %v335
        %v337 = vrot.slane %v324, %v336
        %341 = vmatprep.subr.mxu0 %v277
        %342 = vmatpush1.msra.mxu0 %v276
        %343 = vmatprep.subr.mxu0 %v280
        %344 = vmatpush1.msra.mxu0 %v279
        %345 = vmatprep.subr.mxu0 %v283
        %346 = vmatpush1.msra.mxu0 %v282
        %347 = vmatprep.subr.mxu0 %v286
        %348 = vmatpush1.msra.mxu0 %v285
        %349 = vmatprep.subr.mxu0 %v289
        %350 = vmatpush1.msra.mxu0 %v288
        %351 = vmatprep.subr.mxu0 %v292
        %352 = vmatpush1.msra.mxu0 %v291
        %353 = vmatprep.subr.mxu0 %v295
        %354 = vmatpush1.msra.mxu0 %v294
        %355 = vmatprep.subr.mxu0 %v298
        %356 = vmatpush1.msra.mxu0 %v297
        %357 = vmatprep.subr.mxu0 %v301
        %358 = vmatpush1.msra.mxu0 %v300
        %359 = vmatprep.subr.mxu0 %v304
        %360 = vmatpush1.msra.mxu0 %v303
        %361 = vmatprep.subr.mxu0 %v307
        %362 = vmatpush1.msra.mxu0 %v306
        %363 = vmatprep.subr.mxu0 %v310
        %364 = vmatpush1.msra.mxu0 %v309
        %365 = vmatprep.subr.mxu0 %v313
        %366 = vmatpush1.msra.mxu0 %v312
        %367 = vmatprep.subr.mxu0 %v316
        %368 = vmatpush1.msra.mxu0 %v315
        %369 = vmatprep.subr.mxu0 %v319
        %370 = vmatpush1.msra.mxu0 %v318
        %371 = vmatprep.subr.mxu0 %v322
        %372 = vmatpush1.msra.mxu0 %v321
        %373 = vmatprep.subr.mxu0 0.0
        %374 = vmatpush1.msra.mxu0 0.0
        %375 = vmatprep.subr.mxu0 0.0
        %376 = vmatpush1.msra.mxu0 0.0
        %377 = vmatprep.subr.mxu0 0.0
        %378 = vmatpush1.msra.mxu0 0.0
        %379 = vmatprep.subr.mxu0 0.0
        %380 = vmatpush1.msra.mxu0 0.0
        %381 = vmatprep.subr.mxu0 0.0
        %382 = vmatpush1.msra.mxu0 0.0
        %383 = vmatprep.subr.mxu0 0.0
        %384 = vmatpush1.msra.mxu0 0.0
        %385 = vmatprep.subr.mxu0 0.0
        %386 = vmatpush1.msra.mxu0 0.0
        %387 = vmatprep.subr.mxu0 0.0
        %388 = vmatpush1.msra.mxu0 0.0
        %389 = vmatprep.subr.mxu0 0.0
        %390 = vmatpush1.msra.mxu0 0.0
        %391 = vmatprep.subr.mxu0 0.0
        %392 = vmatpush1.msra.mxu0 0.0
        %393 = vmatprep.subr.mxu0 0.0
        %394 = vmatpush1.msra.mxu0 0.0
        %395 = vmatprep.subr.mxu0 0.0
        %396 = vmatpush1.msra.mxu0 0.0
        %397 = vmatprep.subr.mxu0 0.0
        %398 = vmatpush1.msra.mxu0 0.0
        %399 = vmatprep.subr.mxu0 0.0
        %400 = vmatpush1.msra.mxu0 0.0
        %401 = vmatprep.subr.mxu0 0.0
        %402 = vmatpush1.msra.mxu0 0.0
        %403 = vmatprep.subr.mxu0 0.0
        %404 = vmatpush1.msra.mxu0 0.0
        %405 = vmatprep.mubr.f32.mxu0 0.0
        %406 = vmatmul.mubr.f32.gmra.mrb[0].mxu0 %v274
        %v407 = vpop.f32.mrb[0].mxu0
        %v408 = vadd.f32 %v329, %v407
        %v409 = vpop.f32.mrb[0].mxu0
        %v410 = vadd.f32 %v333, %v409
        %411 = vmatprep.mubr.f32.mxu0 0.0
        %412 = vmatmul.mubr.f32.gmra.mrb[0].mxu0 %v275
        %v413 = vpop.f32.mrb[0].mxu0
        %v414 = vadd.f32 %v329, %v413
        %v415 = vpop.f32.mrb[0].mxu0
        %v416 = vadd.f32 %v333, %v415
        %417 = vdwg.mxu0
        %418 = vmatprep.subr.mxu0 0.0
        %419 = vmatpush1.msra.mxu0 %v278
        %420 = vmatprep.subr.mxu0 0.0
        %421 = vmatpush1.msra.mxu0 %v281
        %422 = vmatprep.subr.mxu0 0.0
        %423 = vmatpush1.msra.mxu0 %v284
        %424 = vmatprep.subr.mxu0 0.0
        %425 = vmatpush1.msra.mxu0 %v287
        %426 = vmatprep.subr.mxu0 0.0
        %427 = vmatpush1.msra.mxu0 %v290
        %428 = vmatprep.subr.mxu0 0.0
        %429 = vmatpush1.msra.mxu0 %v293
        %430 = vmatprep.subr.mxu0 0.0
        %431 = vmatpush1.msra.mxu0 %v296
        %432 = vmatprep.subr.mxu0 0.0
        %433 = vmatpush1.msra.mxu0 %v299
        %434 = vmatprep.subr.mxu0 0.0
        %435 = vmatpush1.msra.mxu0 %v302
        %436 = vmatprep.subr.mxu0 0.0
        %437 = vmatpush1.msra.mxu0 %v305
        %438 = vmatprep.subr.mxu0 0.0
        %439 = vmatpush1.msra.mxu0 %v308
        %440 = vmatprep.subr.mxu0 0.0
        %441 = vmatpush1.msra.mxu0 %v311
        %442 = vmatprep.subr.mxu0 0.0
        %443 = vmatpush1.msra.mxu0 %v314
        %444 = vmatprep.subr.mxu0 0.0
        %445 = vmatpush1.msra.mxu0 %v317
        %446 = vmatprep.subr.mxu0 0.0
        %447 = vmatpush1.msra.mxu0 %v320
        %448 = vmatprep.subr.mxu0 0.0
        %449 = vmatpush1.msra.mxu0 %v323
        %450 = vmatprep.subr.mxu0 0.0
        %451 = vmatpush1.msra.mxu0 0.0
        %452 = vmatprep.subr.mxu0 0.0
        %453 = vmatpush1.msra.mxu0 0.0
        %454 = vmatprep.subr.mxu0 0.0
        %455 = vmatpush1.msra.mxu0 0.0
        %456 = vmatprep.subr.mxu0 0.0
        %457 = vmatpush1.msra.mxu0 0.0
        %458 = vmatprep.subr.mxu0 0.0
        %459 = vmatpush1.msra.mxu0 0.0
        %460 = vmatprep.subr.mxu0 0.0
        %461 = vmatpush1.msra.mxu0 0.0
        %462 = vmatprep.subr.mxu0 0.0
        %463 = vmatpush1.msra.mxu0 0.0
        %464 = vmatprep.subr.mxu0 0.0
        %465 = vmatpush1.msra.mxu0 0.0
        %466 = vmatprep.subr.mxu0 0.0
        %467 = vmatpush1.msra.mxu0 0.0
        %468 = vmatprep.subr.mxu0 0.0
        %469 = vmatpush1.msra.mxu0 0.0
        %470 = vmatprep.subr.mxu0 0.0
        %471 = vmatpush1.msra.mxu0 0.0
        %472 = vmatprep.subr.mxu0 0.0
        %473 = vmatpush1.msra.mxu0 0.0
        %474 = vmatprep.subr.mxu0 0.0
        %475 = vmatpush1.msra.mxu0 0.0
        %476 = vmatprep.subr.mxu0 0.0
        %477 = vmatpush1.msra.mxu0 0.0
        %478 = vmatprep.subr.mxu0 0.0
        %479 = vmatpush1.msra.mxu0 0.0
        %480 = vmatprep.subr.mxu0 0.0
        %481 = vmatpush1.msra.mxu0 0.0
        %482 = vmatprep.mubr.f32.mxu0 0.0
        %483 = vmatmul.mubr.f32.gmra.mrb[0].mxu0 %v274
        %v484 = vpop.f32.mrb[0].mxu0
        %v485 = vadd.f32 %v337, %v484
        %v486 = vpop.f32.mrb[0].mxu0
        %487 = vmatprep.mubr.f32.mxu0 0.0
        %488 = vmatmul.mubr.f32.gmra.mrb[0].mxu0 %v275
        %v489 = vpop.f32.mrb[0].mxu0
        %v490 = vadd.f32 %v337, %v489
        %v491 = vpop.f32.mrb[0].mxu0
        %492 = vdwg.mxu0
        %v493 = vmul.f32 %v408, 0.5
        %v494 = vmul.f32 %v410, 0.5
        %v495 = vmul.f32 %v485, 0.5
        %v496 = vmul.f32 %v414, 0.5
        %v497 = vmul.f32 %v416, 0.5
        %v498 = vmul.f32 %v490, 0.5
        %v499 = vmul.f32 %v408, 0.70710677
        %v500 = vmul.f32 %v410, 0.70710677
        %v501 = vmul.f32 %v485, 0.70710677
        %v502 = vmul.f32 %v414, 0.70710677
        %v503 = vmul.f32 %v416, 0.70710677
        %v504 = vmul.f32 %v490, 0.70710677
        %v505 = verf.f32.pop %v499
        %v506 = verf.f32.pop %v500
        %v507 = verf.f32.pop %v501
        %v508 = verf.f32.pop %v502
        %v509 = verf.f32.pop %v503
        %v510 = verf.f32.pop %v504
        %v511 = vadd.f32 %v505, 1.0
        %v512 = vadd.f32 %v506, 1.0
        %v513 = vadd.f32 %v507, 1.0
        %v514 = vadd.f32 %v508, 1.0
        %v515 = vadd.f32 %v509, 1.0
        %v516 = vadd.f32 %v510, 1.0
        %v517 = vmul.f32 %v493, %v511
        %v518 = vmul.f32 %v494, %v512
        %v519 = vmul.f32 %v495, %v513
        %v520 = vmul.f32 %v496, %v514
        %v521 = vmul.f32 %v497, %v515
        %v522 = vmul.f32 %v498, %v516
        %v523 = vld [vmem:[#allocation7] sm:$0xff]
        %v524 = vld [vmem:[#allocation7 + $0x8] sm:$0xff]
        %v525 = vld [vmem:[#allocation7 + $0x10] sm:$0xff]
        %v526 = vld [vmem:[#allocation7 + $0x18] sm:$0xff]
        %v527 = vld [vmem:[#allocation7 + $0x20] sm:$0xff]
        %v528 = vld [vmem:[#allocation7 + $0x28] sm:$0xff]
        %v529 = vld [vmem:[#allocation7 + $0x30] sm:$0xff]
        %v530 = vld [vmem:[#allocation7 + $0x38] sm:$0xff]
        %v531 = vld [vmem:[#allocation7 + $0x40] sm:$0xff]
        %v532 = vld [vmem:[#allocation7 + $0x48] sm:$0xff]
        %v533 = vld [vmem:[#allocation7 + $0x50] sm:$0xff]
        %v534 = vld [vmem:[#allocation7 + $0x58] sm:$0xff]
        %v535 = vld [vmem:[#allocation7 + $0x60] sm:$0xff]
        %v536 = vld [vmem:[#allocation7 + $0x68] sm:$0xff]
        %v537 = vld [vmem:[#allocation7 + $0x70] sm:$0xff]
        %v538 = vld [vmem:[#allocation7 + $0x78] sm:$0xff]
        %v539 = vld [vmem:[#allocation7 + $0x80] sm:$0xff]
        %v540 = vld [vmem:[#allocation7 + $0x88] sm:$0xff]
        %v541 = vld [vmem:[#allocation7 + $0x90] sm:$0xff]
        %v542 = vld [vmem:[#allocation7 + $0x98] sm:$0xff]
        %v543 = vld [vmem:[#allocation7 + $0xa0] sm:$0xff]
        %v544 = vld [vmem:[#allocation7 + $0xa8] sm:$0xff]
        %v545 = vld [vmem:[#allocation7 + $0xb0] sm:$0xff]
        %v546 = vld [vmem:[#allocation7 + $0xb8] sm:$0xff]
        %v547 = vld [vmem:[#allocation7 + $0xc0] sm:$0xff]
        %v548 = vld [vmem:[#allocation7 + $0xc8] sm:$0xff]
        %v549 = vld [vmem:[#allocation7 + $0xd0] sm:$0xff]
        %v550 = vld [vmem:[#allocation7 + $0xd8] sm:$0xff]
        %v551 = vld [vmem:[#allocation7 + $0xe0] sm:$0xff]
        %v552 = vld [vmem:[#allocation7 + $0xe8] sm:$0xff]
        %v553 = vld [vmem:[#allocation7 + $0xf0] sm:$0xff]
        %v554 = vld [vmem:[#allocation7 + $0xf8] sm:$0xff]
        %v555 = vld [vmem:[#allocation7 + $0x100] sm:$0xff]
        %v556 = vld [vmem:[#allocation7 + $0x108] sm:$0xff]
        %v557 = vld [vmem:[#allocation7 + $0x110] sm:$0xff]
        %v558 = vld [vmem:[#allocation7 + $0x118] sm:$0xff]
        %v559 = vld [vmem:[#allocation7 + $0x120] sm:$0xff]
        %v560 = vld [vmem:[#allocation7 + $0x128] sm:$0xff]
        %v561 = vld [vmem:[#allocation7 + $0x130] sm:$0xff]
        %v562 = vld [vmem:[#allocation7 + $0x138] sm:$0xff]
        %v563 = vld [vmem:[#allocation7 + $0x140] sm:$0xff]
        %v564 = vld [vmem:[#allocation7 + $0x148] sm:$0xff]
        %v565 = vld [vmem:[#allocation7 + $0x150] sm:$0xff]
        %v566 = vld [vmem:[#allocation7 + $0x158] sm:$0xff]
        %v567 = vld [vmem:[#allocation7 + $0x160] sm:$0xff]
        %v568 = vld [vmem:[#allocation7 + $0x168] sm:$0xff]
        %v569 = vld [vmem:[#allocation7 + $0x170] sm:$0xff]
        %v570 = vld [vmem:[#allocation7 + $0x178] sm:$0xff]
        %v571 = vld [vmem:[%s4] sm:$0x1]
        %v573 = vlaneseq
        %v574 = vshrl.u32 %v573, 7
        %v575 = vsub.s32 0, %v574
        %v576 = vrot.slane %v571, %v575
        %578 = vmatprep.subr.mxu0 0.0
        %579 = vmatpush1.msra.mxu0 %v523
        %580 = vmatprep.subr.mxu0 0.0
        %581 = vmatpush1.msra.mxu0 %v524
        %582 = vmatprep.subr.mxu0 0.0
        %583 = vmatpush1.msra.mxu0 %v525
        %584 = vmatprep.subr.mxu0 0.0
        %585 = vmatpush1.msra.mxu0 %v526
        %586 = vmatprep.subr.mxu0 0.0
        %587 = vmatpush1.msra.mxu0 %v527
        %588 = vmatprep.subr.mxu0 0.0
        %589 = vmatpush1.msra.mxu0 %v528
        %590 = vmatprep.subr.mxu0 0.0
        %591 = vmatpush1.msra.mxu0 %v529
        %592 = vmatprep.subr.mxu0 0.0
        %593 = vmatpush1.msra.mxu0 %v530
        %594 = vmatprep.subr.mxu0 0.0
        %595 = vmatpush1.msra.mxu0 %v531
        %596 = vmatprep.subr.mxu0 0.0
        %597 = vmatpush1.msra.mxu0 %v532
        %598 = vmatprep.subr.mxu0 0.0
        %599 = vmatpush1.msra.mxu0 %v533
        %600 = vmatprep.subr.mxu0 0.0
        %601 = vmatpush1.msra.mxu0 %v534
        %602 = vmatprep.subr.mxu0 0.0
        %603 = vmatpush1.msra.mxu0 %v535
        %604 = vmatprep.subr.mxu0 0.0
        %605 = vmatpush1.msra.mxu0 %v536
        %606 = vmatprep.subr.mxu0 0.0
        %607 = vmatpush1.msra.mxu0 %v537
        %608 = vmatprep.subr.mxu0 0.0
        %609 = vmatpush1.msra.mxu0 %v538
        %610 = vmatprep.subr.mxu0 0.0
        %611 = vmatpush1.msra.mxu0 %v539
        %612 = vmatprep.subr.mxu0 0.0
        %613 = vmatpush1.msra.mxu0 %v540
        %614 = vmatprep.subr.mxu0 0.0
        %615 = vmatpush1.msra.mxu0 %v541
        %616 = vmatprep.subr.mxu0 0.0
        %617 = vmatpush1.msra.mxu0 %v542
        %618 = vmatprep.subr.mxu0 0.0
        %619 = vmatpush1.msra.mxu0 %v543
        %620 = vmatprep.subr.mxu0 0.0
        %621 = vmatpush1.msra.mxu0 %v544
        %622 = vmatprep.subr.mxu0 0.0
        %623 = vmatpush1.msra.mxu0 %v545
        %624 = vmatprep.subr.mxu0 0.0
        %625 = vmatpush1.msra.mxu0 %v546
        %626 = vmatprep.subr.mxu0 0.0
        %627 = vmatpush1.msra.mxu0 %v547
        %628 = vmatprep.subr.mxu0 0.0
        %629 = vmatpush1.msra.mxu0 %v548
        %630 = vmatprep.subr.mxu0 0.0
        %631 = vmatpush1.msra.mxu0 %v549
        %632 = vmatprep.subr.mxu0 0.0
        %633 = vmatpush1.msra.mxu0 %v550
        %634 = vmatprep.subr.mxu0 0.0
        %635 = vmatpush1.msra.mxu0 %v551
        %636 = vmatprep.subr.mxu0 0.0
        %637 = vmatpush1.msra.mxu0 %v552
        %638 = vmatprep.subr.mxu0 0.0
        %639 = vmatpush1.msra.mxu0 %v553
        %640 = vmatprep.subr.mxu0 0.0
        %641 = vmatpush1.msra.mxu0 %v554
        %642 = vmatprep.mubr.f32.mxu0 %v518
        %643 = vmatmul.mubr.f32.gmra.mrb[0].mxu0 %v517
        %v644 = vpop.f32.mrb[0].mxu0
        %v645 = vadd.f32 %v576, %v644
        %v646 = vpop.f32.mrb[0].mxu0
        %647 = vmatprep.mubr.f32.mxu0 %v521
        %648 = vmatmul.mubr.f32.gmra.mrb[0].mxu0 %v520
        %v649 = vpop.f32.mrb[0].mxu0
        %v650 = vadd.f32 %v576, %v649
        %v651 = vpop.f32.mrb[0].mxu0
        %652 = vdwg.mxu0
        %653 = vmatprep.subr.mxu0 0.0
        %654 = vmatpush1.msra.mxu0 %v555
        %655 = vmatprep.subr.mxu0 0.0
        %656 = vmatpush1.msra.mxu0 %v556
        %657 = vmatprep.subr.mxu0 0.0
        %658 = vmatpush1.msra.mxu0 %v557
        %659 = vmatprep.subr.mxu0 0.0
        %660 = vmatpush1.msra.mxu0 %v558
        %661 = vmatprep.subr.mxu0 0.0
        %662 = vmatpush1.msra.mxu0 %v559
        %663 = vmatprep.subr.mxu0 0.0
        %664 = vmatpush1.msra.mxu0 %v560
        %665 = vmatprep.subr.mxu0 0.0
        %666 = vmatpush1.msra.mxu0 %v561
        %667 = vmatprep.subr.mxu0 0.0
        %668 = vmatpush1.msra.mxu0 %v562
        %669 = vmatprep.subr.mxu0 0.0
        %670 = vmatpush1.msra.mxu0 %v563
        %671 = vmatprep.subr.mxu0 0.0
        %672 = vmatpush1.msra.mxu0 %v564
        %673 = vmatprep.subr.mxu0 0.0
        %674 = vmatpush1.msra.mxu0 %v565
        %675 = vmatprep.subr.mxu0 0.0
        %676 = vmatpush1.msra.mxu0 %v566
        %677 = vmatprep.subr.mxu0 0.0
        %678 = vmatpush1.msra.mxu0 %v567
        %679 = vmatprep.subr.mxu0 0.0
        %680 = vmatpush1.msra.mxu0 %v568
        %681 = vmatprep.subr.mxu0 0.0
        %682 = vmatpush1.msra.mxu0 %v569
        %683 = vmatprep.subr.mxu0 0.0
        %684 = vmatpush1.msra.mxu0 %v570
        %685 = vmatprep.subr.mxu0 0.0
        %686 = vmatpush1.msra.mxu0 0.0
        %687 = vmatprep.subr.mxu0 0.0
        %688 = vmatpush1.msra.mxu0 0.0
        %689 = vmatprep.subr.mxu0 0.0
        %690 = vmatpush1.msra.mxu0 0.0
        %691 = vmatprep.subr.mxu0 0.0
        %692 = vmatpush1.msra.mxu0 0.0
        %693 = vmatprep.subr.mxu0 0.0
        %694 = vmatpush1.msra.mxu0 0.0
        %695 = vmatprep.subr.mxu0 0.0
        %696 = vmatpush1.msra.mxu0 0.0
        %697 = vmatprep.subr.mxu0 0.0
        %698 = vmatpush1.msra.mxu0 0.0
        %699 = vmatprep.subr.mxu0 0.0
        %700 = vmatpush1.msra.mxu0 0.0
        %701 = vmatprep.subr.mxu0 0.0
        %702 = vmatpush1.msra.mxu0 0.0
        %703 = vmatprep.subr.mxu0 0.0
        %704 = vmatpush1.msra.mxu0 0.0
        %705 = vmatprep.subr.mxu0 0.0
        %706 = vmatpush1.msra.mxu0 0.0
        %707 = vmatprep.subr.mxu0 0.0
        %708 = vmatpush1.msra.mxu0 0.0
        %709 = vmatprep.subr.mxu0 0.0
        %710 = vmatpush1.msra.mxu0 0.0
        %711 = vmatprep.subr.mxu0 0.0
        %712 = vmatpush1.msra.mxu0 0.0
        %713 = vmatprep.subr.mxu0 0.0
        %714 = vmatpush1.msra.mxu0 0.0
        %715 = vmatprep.subr.mxu0 0.0
        %716 = vmatpush1.msra.mxu0 0.0
        %717 = vmatprep.mubr.f32.mxu0 0.0
        %718 = vmatmul.mubr.f32.gmra.mrb[0].mxu0 %v519
        %v719 = vpop.f32.mrb[0].mxu0
        %v720 = vadd.f32 %v645, %v719
        %v721 = vpop.f32.mrb[0].mxu0
        %722 = vmatprep.mubr.f32.mxu0 0.0
        %723 = vmatmul.mubr.f32.gmra.mrb[0].mxu0 %v522
        %v724 = vpop.f32.mrb[0].mxu0
        %v725 = vadd.f32 %v650, %v724
        %v726 = vpop.f32.mrb[0].mxu0
        %727 = vdwg.mxu0
        %728 = vst [vmem:[%s271] sm:$0xff] %v720
        %729 = vst [vmem:[%s271 + $0x8] sm:$0xff] %v725
        %s730 = sand.u32 %s141, 1
        %s731 = scalar_lea.sflag [#allocation4], %s730
        %s732 = sand.u32 %s141, 1
        %s733 = smul.addr %s732, 16
        %s734 = scalar_lea.vmem [#allocation8], %s733
        // Predicated region
        $region53: #{tpu_custom_call.1} parent=39 // pred_check
          %p735 = pneg %p151
        $region54: #{tpu_custom_call.1} parent=39 // pred_check_branch
          %737 = sbr.rel (%p735) target = $region56
        $region55: #{tpu_custom_call.1} parent=39 // pred_region
          %s738 = smul.u32 2, %s23
          %s740 = ssub.s32 256, 256
          %741 = vsyncadd %s731, %s740
          %s742 = smul.addr %s738, 128
          %s743 = scalar_lea.hbm %s5, %s742
          %s744 = sshll.u32 %s734, 4
          %s745 = int_to_ptr.vmem [resolvable:$true] %s744
          %750 = dma.vmem_to_hbm [thread:$0]  %s745, 256, %s743, %s731, 128, 128, 8
        $region56: #{tpu_custom_call.1} parent=39 // pred_fallthru
          _
      $region40: #{tpu_custom_call.1} parent=5 // pred_fallthru
        _
      %p751 = scmp.le.s32.totalorder 2, %s18
      // Predicated region
      $region57: #{tpu_custom_call.1} parent=5 // pred_check
        %p752 = pneg %p751
      $region58: #{tpu_custom_call.1} parent=5 // pred_check_branch
        %754 = sbr.rel (%p752) target = $region60
      $region59: #{tpu_custom_call.1} parent=5 // pred_region
        %s755 = ssub.s32 %s18, 2
        // Predicated region
        $region61: #{tpu_custom_call.1} parent=59 // pred_check
          %p756 = pneg %p157
        $region62: #{tpu_custom_call.1} parent=59 // pred_check_branch
          %758 = sbr.rel (%p756) target = $region64
        $region63: #{tpu_custom_call.1} parent=59 // pred_region
          %s759 = sand.u32 %s142, 1
          %s760 = scalar_lea.sflag [#allocation4], %s759
          %s761 = sand.u32 %s142, 1
          %s762 = smul.addr %s761, 16
          %s763 = scalar_lea.vmem [#allocation8], %s762
          %764 = dma.done %s760, 256
        $region64: #{tpu_custom_call.1} parent=59 // pred_fallthru
          _
      $region60: #{tpu_custom_call.1} parent=5 // pred_fallthru
        _
    $region6: #{tpu_custom_call.1} parent=1 // loop_footer
      %s22 = sadd.s32 1, %s18
    $region7: #{tpu_custom_call.1} parent=1 // loop_footer_branch
      %17 = sbr.rel target = $region3
    $region8: #{tpu_custom_call.1} parent=1 // loop_exit
      _
    %765 = vsyncpa [#allocation3], 1
    %s766 = scalar_lea.sflag [#allocation3], 1
    %767 = vsyncpa %s766, 1
    %768 = vsyncpa [#allocation6], 1
    %769 = vsyncpa [#allocation4], 1
    %s770 = scalar_lea.sflag [#allocation4], 1
    %771 = vsyncpa %s770, 1

</llo_original>
